<compile_context>
chip_gen: v7x
topology: tpu7x:2x2x1
jax: 0.10.0
libtpu: 0.0.40
codegen_flags: <defaults>
</compile_context>

<pallas_src>
import functools

import jax
import jax.numpy as jnp
from jax.experimental import pallas as pl
from jax.experimental.pallas import tpu as pltpu


def _round_up(x, m):
    return ((x + m - 1) // m) * m


def _num_tensorcores_per_chip():
    # v7x has 2 TensorCores per chip; v5e/v6e have 1.
    try:
        kind = jax.devices()[0].device_kind.lower()
    except Exception:
        return 1
    return 2 if ("v7" in kind or "tpu7" in kind) else 1


def _pick_tile_n(n, row_align):
    # Target large row tiles (<=512) to amortize the ~0.35 us per-grid-step
    # overhead. Only force >=2 grid steps on 2-TC chips (v7x) so both cores
    # get work under dimension_semantics=("parallel",); on v5e/v6e the grid
    # is a serial loop, so a single big tile is strictly better for small N.
    if _num_tensorcores_per_chip() >= 2 and n > row_align:
        return min(512, max(row_align, _round_up(pl.cdiv(n, 2), row_align)))
    if n <= 1024:
        return max(row_align, _round_up(n, row_align))
    return 512


def _mlp_forward_kernel(x_ref, w1_ref, b1_ref, w2_ref, b2_ref, out_ref, *,
                        compute_dtype):
    # x_ref : (TN, D_in)    tile of node features (original dtype, e.g. f32)
    # w1_ref: (D_in, H_pad) first-layer weight, resident in VMEM
    # b1_ref: (1, H_pad)    f32 bias (lane-padded)
    # w2_ref: (H_pad, C_pad) second-layer weight, resident (lane-padded)
    # b2_ref: (1, C_pad)    f32 bias (lane-padded)
    # out_ref: (TN, C_pad)  logits tile (lane-dense store)
    exact_f32 = jnp.dtype(compute_dtype) == jnp.dtype(jnp.float32)
    prec = jax.lax.Precision.HIGHEST if exact_f32 else None

    # Cast MXU operands in-kernel (no separate wrapper HBM pass).
    x = x_ref[...].astype(compute_dtype)

    # layer 1: MXU matmul (f32 accumulation), bias + ReLU on the VPU.
    h = jnp.dot(x, w1_ref[...], preferred_element_type=jnp.float32,
                precision=prec)
    h = jnp.maximum(h + b1_ref[...], 0.0)          # "second_last_h"

    # layer 2: classifier head.
    o = jnp.dot(h.astype(w2_ref.dtype), w2_ref[...],
                preferred_element_type=jnp.float32, precision=prec)
    out_ref[...] = (o + b2_ref[...]).astype(out_ref.dtype)


def ergnn_net_forward(features, w1, b1, w2, b2, *, tile_n=None,
                      compute_dtype=jnp.bfloat16, out_dtype=jnp.float32,
                      return_padded=False):
    """Pallas implementation of NET.forward(features)."""
    n, d_in = features.shape
    h_dim = w1.shape[1]
    n_cls = w2.shape[1]

    h_pad = _round_up(h_dim, 128)   # lane-dense hidden; ReLU(0)=0 & zero W2 rows
    c_pad = _round_up(n_cls, 128)   # lane-dense logits store (unmasked vst)

    # Weight/bias prep is tiny (no feature-sized passes). Biases stay f32 so
    # the VPU-side add/ReLU path is clean on v5e too.
    w1c = w1.astype(compute_dtype)
    w2c = w2.astype(compute_dtype)
    b1f = b1.reshape(1, h_dim).astype(jnp.float32)
    b2f = b2.reshape(1, n_cls).astype(jnp.float32)
    if h_pad != h_dim:
        w1c = jnp.pad(w1c, ((0, 0), (0, h_pad - h_dim)))
        b1f = jnp.pad(b1f, ((0, 0), (0, h_pad - h_dim)))
        w2c = jnp.pad(w2c, ((0, h_pad - h_dim), (0, 0)))
    if c_pad != n_cls:
        w2c = jnp.pad(w2c, ((0, 0), (0, c_pad - n_cls)))
        b2f = jnp.pad(b2f, ((0, 0), (0, c_pad - n_cls)))

    comp_itemsize = jnp.dtype(compute_dtype).itemsize
    row_align = 8 if comp_itemsize >= 4 else (16 if comp_itemsize == 2 else 32)
    if tile_n is None:
        tile_n = _pick_tile_n(n, row_align)
    grid = (pl.cdiv(n, tile_n),)   # ragged last row block is masked by Pallas

    # Explicit VMEM budget (single-buffered resident weights + double-buffered
    # feature / output tiles + hidden + staging), with generous headroom.
    # TODO(synk): for very large D_in/H add a K-tiled "arbitrary" grid axis;
    # size the resident-weights threshold for v7x (64 MiB physical / 32 MiB
    # scoped VMEM), not the 128 MiB of v5e/v6e.
    out_itemsize = jnp.dtype(out_dtype).itemsize
    vmem_bytes = (
        2 * tile_n * d_in * features.dtype.itemsize      # feature tile x2 bufs
        + d_in * h_pad * comp_itemsize                   # W1 (single buffer)
        + h_pad * c_pad * comp_itemsize                  # W2 (single buffer)
        + 2 * 8 * (h_pad + c_pad) * 4                    # biases (sublane-padded)
        + 2 * tile_n * c_pad * out_itemsize              # output tile x2 bufs
        + tile_n * h_pad * 4                             # hidden activation
        + tile_n * max(d_in, h_pad) * 4                  # cast / matmul staging
    )
    vmem_limit = int(min(64 << 20, max(16 << 20, 2 * vmem_bytes + (2 << 20))))

    out = pl.pallas_call(
        functools.partial(_mlp_forward_kernel, compute_dtype=compute_dtype),
        out_shape=jax.ShapeDtypeStruct((n, c_pad), out_dtype),
        grid_spec=pltpu.PrefetchScalarGridSpec(
            num_scalar_prefetch=0,
            grid=grid,
            in_specs=[
                pl.BlockSpec((tile_n, d_in), lambda i: (i, 0)),   # features tile
                pl.BlockSpec((d_in, h_pad), lambda i: (0, 0),     # W1 resident
                             pipeline_mode=pl.Buffered(1)),
                pl.BlockSpec((1, h_pad), lambda i: (0, 0),        # b1
                             pipeline_mode=pl.Buffered(1)),
                pl.BlockSpec((h_pad, c_pad), lambda i: (0, 0),    # W2 resident
                             pipeline_mode=pl.Buffered(1)),
                pl.BlockSpec((1, c_pad), lambda i: (0, 0),        # b2
                             pipeline_mode=pl.Buffered(1)),
            ],
            out_specs=pl.BlockSpec((tile_n, c_pad), lambda i: (i, 0)),
        ),
        compiler_params=pltpu.CompilerParams(
            dimension_semantics=("parallel",),
            vmem_limit_bytes=vmem_limit),
    )(features, w1c, b1f, w2c, b2f)

    if return_padded:
        # Consumer slices [:, :n_cls] lazily / fuses it into the next op,
        # avoiding an extra full HBM read+write here.
        return out
    return out[:, :n_cls]


def _reference_forward(features, w1, b1, w2, b2):
    hp = jax.lax.Precision.HIGHEST
    h = jnp.maximum(
        jnp.dot(features.astype(jnp.float32), w1, precision=hp)
        + b1.reshape(1, -1), 0.0)
    return jnp.dot(h, w2, precision=hp) + b2.reshape(1, -1)


if __name__ == "__main__":
    # Small synthetic shapes consistent with the module:
    #   N nodes = 500 (deliberately not a tile multiple), feature dim = 32,
    #   hidden = 64, n_cls = 16
    N, D_IN, HID, N_CLS = 500, 32, 64, 16

    key = jax.random.PRNGKey(0)
    k_x, k_w1, k_b1, k_w2, k_b2 = jax.random.split(key, 5)

    features = jax.random.normal(k_x, (N, D_IN), dtype=jnp.float32)
    # Deterministic parameter init (synthetic; no checkpoint load).
    w1 = jax.random.normal(k_w1, (D_IN, HID), dtype=jnp.float32) * 0.1
    b1 = jax.random.normal(k_b1, (1, HID), dtype=jnp.float32) * 0.01
    w2 = jax.random.normal(k_w2, (HID, N_CLS), dtype=jnp.float32) * 0.1
    b2 = jax.random.normal(k_b2, (1, N_CLS), dtype=jnp.float32) * 0.01

    ref = _reference_forward(features, w1, b1, w2, b2)

    # Fast path: bf16 MXU operands (in-kernel cast), f32 logits.
    out = ergnn_net_forward(features, w1, b1, w2, b2)
    out = jax.block_until_ready(out)
    assert out.shape == (N, N_CLS)
    assert jnp.allclose(out, ref, atol=5e-2, rtol=5e-2), float(
        jnp.max(jnp.abs(out - ref)))

    # bf16 logits store (halves output writeback); looser tolerance.
    out_bf16 = ergnn_net_forward(features, w1, b1, w2, b2,
                                 out_dtype=jnp.bfloat16)
    out_bf16 = jax.block_until_ready(out_bf16)
    assert out_bf16.dtype == jnp.bfloat16
    assert jnp.allclose(out_bf16.astype(jnp.float32), ref,
                        atol=1e-1, rtol=1e-1), float(
        jnp.max(jnp.abs(out_bf16.astype(jnp.float32) - ref)))

    # Full-precision path: exact original f32 semantics (HIGHEST precision).
    out_f32 = ergnn_net_forward(features, w1, b1, w2, b2,
                                compute_dtype=jnp.float32)
    out_f32 = jax.block_until_ready(out_f32)
    assert jnp.allclose(out_f32, ref, atol=1e-4, rtol=1e-4), float(
        jnp.max(jnp.abs(out_f32 - ref)))

    print("KERNEL_OK")
</pallas_src>

<mosaic_0001>
module attributes {stable_mosaic.version = 11 : i64} {
  func.func @_mlp_forward_kernel(%arg0: i32, %arg1: memref<512x32xf32, #tpu.memory_space<vmem>>, %arg2: memref<32x128xbf16, #tpu.memory_space<vmem>>, %arg3: memref<1x128xf32, #tpu.memory_space<vmem>>, %arg4: memref<128x128xbf16, #tpu.memory_space<vmem>>, %arg5: memref<1x128xf32, #tpu.memory_space<vmem>>, %arg6: memref<512x128xf32, #tpu.memory_space<vmem>>) attributes {dimension_semantics = [#tpu.dimension_semantics<parallel>], iteration_bounds = array<i64: 1>, scalar_prefetch = 0 : i64, scratch_operands = 0 : i64, tpu.core_type = #tpu.core_type<tc>, window_params = [{transform_indices = @transform_0, window_bounds = array<i64: 512, 32>}, {pipeline_mode = #tpu.pipeline_mode<synchronous>, transform_indices = @transform_1, window_bounds = array<i64: 32, 128>}, {pipeline_mode = #tpu.pipeline_mode<synchronous>, transform_indices = @transform_2, window_bounds = array<i64: 1, 128>}, {pipeline_mode = #tpu.pipeline_mode<synchronous>, transform_indices = @transform_3, window_bounds = array<i64: 128, 128>}, {pipeline_mode = #tpu.pipeline_mode<synchronous>, transform_indices = @transform_4, window_bounds = array<i64: 1, 128>}, {transform_indices = @transform_5, window_bounds = array<i64: 512, 128>}]} {
    %c0 = arith.constant 0 : index
    %c0_0 = arith.constant 0 : index
    %0 = vector.load %arg1[%c0, %c0_0] : memref<512x32xf32, #tpu.memory_space<vmem>>, vector<512x32xf32>
    %1 = arith.truncf %0 : vector<512x32xf32> to vector<512x32xbf16>
    %c0_1 = arith.constant 0 : index
    %c0_2 = arith.constant 0 : index
    %2 = vector.load %arg2[%c0_1, %c0_2] : memref<32x128xbf16, #tpu.memory_space<vmem>>, vector<32x128xbf16>
    %cst = arith.constant dense<0.000000e+00> : vector<512x128xf32>
    %3 = tpu.matmul %1, %2, %cst {dimension_numbers = #tpu.dot_dimension_numbers<[1], [0], [0], [1], [0, 0, 1, 1], [], []>} : vector<512x32xbf16>, vector<32x128xbf16>, vector<512x128xf32> -> vector<512x128xf32>
    %c0_3 = arith.constant 0 : index
    %c0_4 = arith.constant 0 : index
    %4 = vector.load %arg3[%c0_3, %c0_4] : memref<1x128xf32, #tpu.memory_space<vmem>>, vector<1x128xf32>
    %5 = vector.broadcast %4 : vector<1x128xf32> to vector<512x128xf32>
    %6 = arith.addf %3, %5 : vector<512x128xf32>
    %cst_5 = arith.constant 0.000000e+00 : f32
    %7 = vector.broadcast %cst_5 : f32 to vector<512x128xf32>
    %8 = arith.maximumf %6, %7 : vector<512x128xf32>
    %9 = arith.truncf %8 : vector<512x128xf32> to vector<512x128xbf16>
    %c0_6 = arith.constant 0 : index
    %c0_7 = arith.constant 0 : index
    %10 = vector.load %arg4[%c0_6, %c0_7] : memref<128x128xbf16, #tpu.memory_space<vmem>>, vector<128x128xbf16>
    %cst_8 = arith.constant dense<0.000000e+00> : vector<512x128xf32>
    %11 = tpu.matmul %9, %10, %cst_8 {dimension_numbers = #tpu.dot_dimension_numbers<[1], [0], [0], [1], [0, 0, 1, 1], [], []>} : vector<512x128xbf16>, vector<128x128xbf16>, vector<512x128xf32> -> vector<512x128xf32>
    %c0_9 = arith.constant 0 : index
    %c0_10 = arith.constant 0 : index
    %12 = vector.load %arg5[%c0_9, %c0_10] : memref<1x128xf32, #tpu.memory_space<vmem>>, vector<1x128xf32>
    %13 = vector.broadcast %12 : vector<1x128xf32> to vector<512x128xf32>
    %14 = arith.addf %11, %13 : vector<512x128xf32>
    %c0_11 = arith.constant 0 : index
    %c0_12 = arith.constant 0 : index
    %15 = vector.load %arg6[%c0_11, %c0_12] : memref<512x128xf32, #tpu.memory_space<vmem>>, vector<512x128xf32>
    tpu.vector_store %arg6[%c0_11, %c0_12], %14 {strides = array<i32>} : memref<512x128xf32, #tpu.memory_space<vmem>>, vector<512x128xf32>,
    return
  }
  func.func @transform_0(%arg0: i32) -> (i32, i32) {
    %c0_i32 = arith.constant 0 : i32
    %c0_i32_0 = arith.constant 0 : i32
    return %arg0, %c0_i32 : i32, i32
  }
  func.func @transform_1(%arg0: i32) -> (i32, i32) {
    %c0_i32 = arith.constant 0 : i32
    %c0_i32_0 = arith.constant 0 : i32
    %c0_i32_1 = arith.constant 0 : i32
    return %c0_i32, %c0_i32_0 : i32, i32
  }
  func.func @transform_2(%arg0: i32) -> (i32, i32) {
    %c0_i32 = arith.constant 0 : i32
    %c0_i32_0 = arith.constant 0 : i32
    %c0_i32_1 = arith.constant 0 : i32
    return %c0_i32, %c0_i32_0 : i32, i32
  }
  func.func @transform_3(%arg0: i32) -> (i32, i32) {
    %c0_i32 = arith.constant 0 : i32
    %c0_i32_0 = arith.constant 0 : i32
    %c0_i32_1 = arith.constant 0 : i32
    return %c0_i32, %c0_i32_0 : i32, i32
  }
  func.func @transform_4(%arg0: i32) -> (i32, i32) {
    %c0_i32 = arith.constant 0 : i32
    %c0_i32_0 = arith.constant 0 : i32
    %c0_i32_1 = arith.constant 0 : i32
    return %c0_i32, %c0_i32_0 : i32, i32
  }
  func.func @transform_5(%arg0: i32) -> (i32, i32) {
    %c0_i32 = arith.constant 0 : i32
    %c0_i32_0 = arith.constant 0 : i32
    return %arg0, %c0_i32 : i32, i32
  }
}

</mosaic_0001>

<llo_original>
// kernel: tpu_custom_call.1
$region0: #{tpu_custom_call.1}
  #allocation0 [shape = 'u32[]', space=smem, size = 0x4, offset = 0x4, fixed_abs, tag = 'smem constant byte address 0x4 - core index']
  #allocation1 [shape = 'u32[144,128]{1,0:T(1,128)}', space=vmem, size = 0x12000, scoped, tag = 'internal scratch']
  %s0 = inlined_call_operand.vmem [shape: f32[500,32], index: 0, kind: input, shape index: {}]
  %s1 = inlined_call_operand.vmem [shape: bf16[32,128], index: 1, kind: input, shape index: {}]
  %s2 = inlined_call_operand.vmem [shape: f32[1,128], index: 2, kind: input, shape index: {}]
  %s3 = inlined_call_operand.vmem [shape: bf16[128,128], index: 3, kind: input, shape index: {}]
  %s4 = inlined_call_operand.vmem [shape: f32[1,128], index: 4, kind: input, shape index: {}]
  %s5 = inlined_call_operand.hbm [shape: f32[500,128], index: 5, kind: output, shape index: {}]
  %s6 = sld [smem:[#allocation0]]
  $region30: #{tpu_custom_call.1} parent=0
    _
  %s8 = ssub.s32 1, %s6
  %s9 = scalar_select 0, %s8, %s6
  $region1: #{tpu_custom_call.1} parent=0
    #allocation2 [shape = 'u8[262144]{0}', space=vmem, size = 0x40000, scoped, tag = 'output window, operand 0, single buffered']
    #allocation3 [shape = 's32[1]{0}', space=sflag, size = 0x4, scoped, tag = 'scoped memory for tpu_custom_call.1']
    %10 = vsyncpa [#allocation3], 0
    // Predicated region
    $region2: #{tpu_custom_call.1} parent=1 // pred_check
      _
    $region3: #{tpu_custom_call.1} parent=1 // pred_check_branch
      %12 = sbr.rel (0) target = $region5
    $region4: #{tpu_custom_call.1} parent=1 // pred_region
      _
    $region5: #{tpu_custom_call.1} parent=1 // pred_fallthru
      _
    // Predicated region
    $region6: #{tpu_custom_call.1} parent=1 // pred_check
      _
    $region7: #{tpu_custom_call.1} parent=1 // pred_check_branch
      %14 = sbr.rel (0) target = $region9
    $region8: #{tpu_custom_call.1} parent=1 // pred_region
      _
    $region9: #{tpu_custom_call.1} parent=1 // pred_fallthru
      _
    // Predicated region
    $region10: #{tpu_custom_call.1} parent=1 // pred_check
      _
    $region11: #{tpu_custom_call.1} parent=1 // pred_check_branch
      %16 = sbr.rel (0) target = $region13
    $region12: #{tpu_custom_call.1} parent=1 // pred_region
      _
    $region13: #{tpu_custom_call.1} parent=1 // pred_fallthru
      _
    // Predicated region
    $region14: #{tpu_custom_call.1} parent=1 // pred_check
      _
    $region15: #{tpu_custom_call.1} parent=1 // pred_check_branch
      %18 = sbr.rel (0) target = $region17
    $region16: #{tpu_custom_call.1} parent=1 // pred_region
      _
    $region17: #{tpu_custom_call.1} parent=1 // pred_fallthru
      _
    // Predicated region
    $region18: #{tpu_custom_call.1} parent=1 // pred_check
      _
    $region19: #{tpu_custom_call.1} parent=1 // pred_check_branch
      %20 = sbr.rel (0) target = $region21
    $region20: #{tpu_custom_call.1} parent=1 // pred_region
      _
    $region21: #{tpu_custom_call.1} parent=1 // pred_fallthru
      _
    %v22 = vld [vmem:[%s0] sm:$0xff]
    %v23 = vld [vmem:[%s0 + $0x8] sm:$0xff]
    %v24 = vld [vmem:[%s0 + $0x10] sm:$0xff]
    %v25 = vld [vmem:[%s0 + $0x18] sm:$0xff]
    %v26 = vld [vmem:[%s0 + $0x20] sm:$0xff]
    %v27 = vld [vmem:[%s0 + $0x28] sm:$0xff]
    %v28 = vld [vmem:[%s0 + $0x30] sm:$0xff]
    %v29 = vld [vmem:[%s0 + $0x38] sm:$0xff]
    %v30 = vld [vmem:[%s0 + $0x40] sm:$0xff]
    %v31 = vld [vmem:[%s0 + $0x48] sm:$0xff]
    %v32 = vld [vmem:[%s0 + $0x50] sm:$0xff]
    %v33 = vld [vmem:[%s0 + $0x58] sm:$0xff]
    %v34 = vld [vmem:[%s0 + $0x60] sm:$0xff]
    %v35 = vld [vmem:[%s0 + $0x68] sm:$0xff]
    %v36 = vld [vmem:[%s0 + $0x70] sm:$0xff]
    %v37 = vld [vmem:[%s0 + $0x78] sm:$0xff]
    %v38 = vld [vmem:[%s0 + $0x80] sm:$0xff]
    %v39 = vld [vmem:[%s0 + $0x88] sm:$0xff]
    %v40 = vld [vmem:[%s0 + $0x90] sm:$0xff]
    %v41 = vld [vmem:[%s0 + $0x98] sm:$0xff]
    %v42 = vld [vmem:[%s0 + $0xa0] sm:$0xff]
    %v43 = vld [vmem:[%s0 + $0xa8] sm:$0xff]
    %v44 = vld [vmem:[%s0 + $0xb0] sm:$0xff]
    %v45 = vld [vmem:[%s0 + $0xb8] sm:$0xff]
    %v46 = vld [vmem:[%s0 + $0xc0] sm:$0xff]
    %v47 = vld [vmem:[%s0 + $0xc8] sm:$0xff]
    %v48 = vld [vmem:[%s0 + $0xd0] sm:$0xff]
    %v49 = vld [vmem:[%s0 + $0xd8] sm:$0xff]
    %v50 = vld [vmem:[%s0 + $0xe0] sm:$0xff]
    %v51 = vld [vmem:[%s0 + $0xe8] sm:$0xff]
    %v52 = vld [vmem:[%s0 + $0xf0] sm:$0xff]
    %v53 = vld [vmem:[%s0 + $0xf8] sm:$0xff]
    %v54 = vld [vmem:[%s0 + $0x100] sm:$0xff]
    %v55 = vld [vmem:[%s0 + $0x108] sm:$0xff]
    %v56 = vld [vmem:[%s0 + $0x110] sm:$0xff]
    %v57 = vld [vmem:[%s0 + $0x118] sm:$0xff]
    %v58 = vld [vmem:[%s0 + $0x120] sm:$0xff]
    %v59 = vld [vmem:[%s0 + $0x128] sm:$0xff]
    %v60 = vld [vmem:[%s0 + $0x130] sm:$0xff]
    %v61 = vld [vmem:[%s0 + $0x138] sm:$0xff]
    %v62 = vld [vmem:[%s0 + $0x140] sm:$0xff]
    %v63 = vld [vmem:[%s0 + $0x148] sm:$0xff]
    %v64 = vld [vmem:[%s0 + $0x150] sm:$0xff]
    %v65 = vld [vmem:[%s0 + $0x158] sm:$0xff]
    %v66 = vld [vmem:[%s0 + $0x160] sm:$0xff]
    %v67 = vld [vmem:[%s0 + $0x168] sm:$0xff]
    %v68 = vld [vmem:[%s0 + $0x170] sm:$0xff]
    %v69 = vld [vmem:[%s0 + $0x178] sm:$0xff]
    %v70 = vld [vmem:[%s0 + $0x180] sm:$0xff]
    %v71 = vld [vmem:[%s0 + $0x188] sm:$0xff]
    %v72 = vld [vmem:[%s0 + $0x190] sm:$0xff]
    %v73 = vld [vmem:[%s0 + $0x198] sm:$0xff]
    %v74 = vld [vmem:[%s0 + $0x1a0] sm:$0xff]
    %v75 = vld [vmem:[%s0 + $0x1a8] sm:$0xff]
    %v76 = vld [vmem:[%s0 + $0x1b0] sm:$0xff]
    %v77 = vld [vmem:[%s0 + $0x1b8] sm:$0xff]
    %v78 = vld [vmem:[%s0 + $0x1c0] sm:$0xff]
    %v79 = vld [vmem:[%s0 + $0x1c8] sm:$0xff]
    %v80 = vld [vmem:[%s0 + $0x1d0] sm:$0xff]
    %v81 = vld [vmem:[%s0 + $0x1d8] sm:$0xff]
    %v82 = vld [vmem:[%s0 + $0x1e0] sm:$0xff]
    %v83 = vld [vmem:[%s0 + $0x1e8] sm:$0xff]
    %v84 = vld [vmem:[%s0 + $0x1f0] sm:$0xff]
    %v85 = vld [vmem:[%s0 + $0x1f8] sm:$0xff]
    %v86 = vpack.c.bf16 %v23, %v22
    %v87 = vpack.c.bf16 %v25, %v24
    %v88 = vpack.c.bf16 %v27, %v26
    %v89 = vpack.c.bf16 %v29, %v28
    %v90 = vpack.c.bf16 %v31, %v30
    %v91 = vpack.c.bf16 %v33, %v32
    %v92 = vpack.c.bf16 %v35, %v34
    %v93 = vpack.c.bf16 %v37, %v36
    %v94 = vpack.c.bf16 %v39, %v38
    %v95 = vpack.c.bf16 %v41, %v40
    %v96 = vpack.c.bf16 %v43, %v42
    %v97 = vpack.c.bf16 %v45, %v44
    %v98 = vpack.c.bf16 %v47, %v46
    %v99 = vpack.c.bf16 %v49, %v48
    %v100 = vpack.c.bf16 %v51, %v50
    %v101 = vpack.c.bf16 %v53, %v52
    %v102 = vpack.c.bf16 %v55, %v54
    %v103 = vpack.c.bf16 %v57, %v56
    %v104 = vpack.c.bf16 %v59, %v58
    %v105 = vpack.c.bf16 %v61, %v60
    %v106 = vpack.c.bf16 %v63, %v62
    %v107 = vpack.c.bf16 %v65, %v64
    %v108 = vpack.c.bf16 %v67, %v66
    %v109 = vpack.c.bf16 %v69, %v68
    %v110 = vpack.c.bf16 %v71, %v70
    %v111 = vpack.c.bf16 %v73, %v72
    %v112 = vpack.c.bf16 %v75, %v74
    %v113 = vpack.c.bf16 %v77, %v76
    %v114 = vpack.c.bf16 %v79, %v78
    %v115 = vpack.c.bf16 %v81, %v80
    %v116 = vpack.c.bf16 %v83, %v82
    %v117 = vpack.c.bf16 %v85, %v84
    %v118 = vld [vmem:[%s1] sm:$0xf]
    %v119 = vld [vmem:[%s1 + $0x4] sm:$0xf]
    %v120 = vld [vmem:[%s1 + $0x8] sm:$0xf]
    %v121 = vld [vmem:[%s1 + $0xc] sm:$0xf]
    %v122 = vld [vmem:[%s2] sm:$0x1]
    %v124 = vlaneseq
    %v125 = vshrl.u32 %v124, 7
    %v126 = vsub.s32 0, %v125
    %v127 = vrot.slane %v122, %v126
    %v133 = vunpack.c.l.b16 %v118
    %v134 = vunpack.c.l.b16 %v119
    %v135 = vunpack.c.l.b16 %v120
    %v136 = vunpack.c.l.b16 %v121
    %v137 = vpack.c.b16 %v134, %v133
    %v138 = vpack.c.b16 %v136, %v135
    %vm141 = vcmask 261120
    %v143 = vsel %vm141, %v86, 0
    %v146 = vsel %vm141, %v87, 0
    %v149 = vsel %vm141, %v88, 0
    %v152 = vsel %vm141, %v89, 0
    %v155 = vsel %vm141, %v90, 0
    %v158 = vsel %vm141, %v91, 0
    %v161 = vsel %vm141, %v92, 0
    %v164 = vsel %vm141, %v93, 0
    %v167 = vsel %vm141, %v94, 0
    %v170 = vsel %vm141, %v95, 0
    %v173 = vsel %vm141, %v96, 0
    %v176 = vsel %vm141, %v97, 0
    %v179 = vsel %vm141, %v98, 0
    %v182 = vsel %vm141, %v99, 0
    %v185 = vsel %vm141, %v100, 0
    %v188 = vsel %vm141, %v101, 0
    %v191 = vsel %vm141, %v102, 0
    %v194 = vsel %vm141, %v103, 0
    %v197 = vsel %vm141, %v104, 0
    %v200 = vsel %vm141, %v105, 0
    %v203 = vsel %vm141, %v106, 0
    %v206 = vsel %vm141, %v107, 0
    %v209 = vsel %vm141, %v108, 0
    %v212 = vsel %vm141, %v109, 0
    %v215 = vsel %vm141, %v110, 0
    %v218 = vsel %vm141, %v111, 0
    %v221 = vsel %vm141, %v112, 0
    %v224 = vsel %vm141, %v113, 0
    %v227 = vsel %vm141, %v114, 0
    %v230 = vsel %vm141, %v115, 0
    %v233 = vsel %vm141, %v116, 0
    %v236 = vsel %vm141, %v117, 0
    %238 = vmatprep.subr.bf16.mxu0 0
    %239 = vmatpush1.bf16.msra.mxu0 %v137
    %240 = vmatprep.subr.bf16.mxu0 0
    %241 = vmatpush1.bf16.msra.mxu0 %v138
    %242 = vmatprep.subr.bf16.mxu0 0
    %243 = vmatpush1.bf16.msra.mxu0 0
    %244 = vmatprep.subr.bf16.mxu0 0
    %245 = vmatpush1.bf16.msra.mxu0 0
    %246 = vmatprep.subr.bf16.mxu0 0
    %247 = vmatpush1.bf16.msra.mxu0 0
    %248 = vmatprep.subr.bf16.mxu0 0
    %249 = vmatpush1.bf16.msra.mxu0 0
    %250 = vmatprep.subr.bf16.mxu0 0
    %251 = vmatpush1.bf16.msra.mxu0 0
    %252 = vmatprep.subr.bf16.mxu0 0
    %253 = vmatpush1.bf16.msra.mxu0 0
    %254 = vmatprep.subr.bf16.mxu0 0
    %255 = vmatpush1.bf16.msra.mxu0 0
    %256 = vmatprep.subr.bf16.mxu0 0
    %257 = vmatpush1.bf16.msra.mxu0 0
    %258 = vmatprep.subr.bf16.mxu0 0
    %259 = vmatpush1.bf16.msra.mxu0 0
    %260 = vmatprep.subr.bf16.mxu0 0
    %261 = vmatpush1.bf16.msra.mxu0 0
    %262 = vmatprep.subr.bf16.mxu0 0
    %263 = vmatpush1.bf16.msra.mxu0 0
    %264 = vmatprep.subr.bf16.mxu0 0
    %265 = vmatpush1.bf16.msra.mxu0 0
    %266 = vmatprep.subr.bf16.mxu0 0
    %267 = vmatpush1.bf16.msra.mxu0 0
    %268 = vmatprep.subr.bf16.mxu0 0
    %269 = vmatpush1.bf16.msra.mxu0 0
    %270 = vmatprep.mubr.bf16.mxu0 0
    %271 = vmatmul.mubr.bf16.gmra.mrb[0].mxu0 %v143
    %v272 = vpop.f32.mrb[0].mxu0
    %v273 = vadd.f32 %v127, %v272
    %v274 = vpop.f32.mrb[0].mxu0
    %v275 = vpop.f32.mrb[0].mxu0
    %v276 = vadd.f32 %v127, %v275
    %v277 = vpop.f32.mrb[0].mxu0
    %278 = vmatprep.mubr.bf16.mxu0 0
    %279 = vmatmul.mubr.bf16.gmra.mrb[0].mxu0 %v146
    %v280 = vpop.f32.mrb[0].mxu0
    %v281 = vadd.f32 %v127, %v280
    %v282 = vpop.f32.mrb[0].mxu0
    %v283 = vpop.f32.mrb[0].mxu0
    %v284 = vadd.f32 %v127, %v283
    %v285 = vpop.f32.mrb[0].mxu0
    %286 = vmatprep.mubr.bf16.mxu0 0
    %287 = vmatmul.mubr.bf16.gmra.mrb[0].mxu0 %v149
    %v288 = vpop.f32.mrb[0].mxu0
    %v289 = vadd.f32 %v127, %v288
    %v290 = vpop.f32.mrb[0].mxu0
    %v291 = vpop.f32.mrb[0].mxu0
    %v292 = vadd.f32 %v127, %v291
    %v293 = vpop.f32.mrb[0].mxu0
    %294 = vmatprep.mubr.bf16.mxu0 0
    %295 = vmatmul.mubr.bf16.gmra.mrb[0].mxu0 %v152
    %v296 = vpop.f32.mrb[0].mxu0
    %v297 = vadd.f32 %v127, %v296
    %v298 = vpop.f32.mrb[0].mxu0
    %v299 = vpop.f32.mrb[0].mxu0
    %v300 = vadd.f32 %v127, %v299
    %v301 = vpop.f32.mrb[0].mxu0
    %302 = vmatprep.mubr.bf16.mxu0 0
    %303 = vmatmul.mubr.bf16.gmra.mrb[0].mxu0 %v155
    %v304 = vpop.f32.mrb[0].mxu0
    %v305 = vadd.f32 %v127, %v304
    %v306 = vpop.f32.mrb[0].mxu0
    %v307 = vpop.f32.mrb[0].mxu0
    %v308 = vadd.f32 %v127, %v307
    %v309 = vpop.f32.mrb[0].mxu0
    %310 = vmatprep.mubr.bf16.mxu0 0
    %311 = vmatmul.mubr.bf16.gmra.mrb[0].mxu0 %v158
    %v312 = vpop.f32.mrb[0].mxu0
    %v313 = vadd.f32 %v127, %v312
    %v314 = vpop.f32.mrb[0].mxu0
    %v315 = vpop.f32.mrb[0].mxu0
    %v316 = vadd.f32 %v127, %v315
    %v317 = vpop.f32.mrb[0].mxu0
    %318 = vmatprep.mubr.bf16.mxu0 0
    %319 = vmatmul.mubr.bf16.gmra.mrb[0].mxu0 %v161
    %v320 = vpop.f32.mrb[0].mxu0
    %v321 = vadd.f32 %v127, %v320
    %v322 = vpop.f32.mrb[0].mxu0
    %v323 = vpop.f32.mrb[0].mxu0
    %v324 = vadd.f32 %v127, %v323
    %v325 = vpop.f32.mrb[0].mxu0
    %326 = vmatprep.mubr.bf16.mxu0 0
    %327 = vmatmul.mubr.bf16.gmra.mrb[0].mxu0 %v164
    %v328 = vpop.f32.mrb[0].mxu0
    %v329 = vadd.f32 %v127, %v328
    %v330 = vpop.f32.mrb[0].mxu0
    %v331 = vpop.f32.mrb[0].mxu0
    %v332 = vadd.f32 %v127, %v331
    %v333 = vpop.f32.mrb[0].mxu0
    %334 = vmatprep.mubr.bf16.mxu0 0
    %335 = vmatmul.mubr.bf16.gmra.mrb[0].mxu0 %v167
    %v336 = vpop.f32.mrb[0].mxu0
    %v337 = vadd.f32 %v127, %v336
    %v338 = vpop.f32.mrb[0].mxu0
    %v339 = vpop.f32.mrb[0].mxu0
    %v340 = vadd.f32 %v127, %v339
    %v341 = vpop.f32.mrb[0].mxu0
    %342 = vmatprep.mubr.bf16.mxu0 0
    %343 = vmatmul.mubr.bf16.gmra.mrb[0].mxu0 %v170
    %v344 = vpop.f32.mrb[0].mxu0
    %v345 = vadd.f32 %v127, %v344
    %v346 = vpop.f32.mrb[0].mxu0
    %v347 = vpop.f32.mrb[0].mxu0
    %v348 = vadd.f32 %v127, %v347
    %v349 = vpop.f32.mrb[0].mxu0
    %350 = vmatprep.mubr.bf16.mxu0 0
    %351 = vmatmul.mubr.bf16.gmra.mrb[0].mxu0 %v173
    %v352 = vpop.f32.mrb[0].mxu0
    %v353 = vadd.f32 %v127, %v352
    %v354 = vpop.f32.mrb[0].mxu0
    %v355 = vpop.f32.mrb[0].mxu0
    %v356 = vadd.f32 %v127, %v355
    %v357 = vpop.f32.mrb[0].mxu0
    %358 = vmatprep.mubr.bf16.mxu0 0
    %359 = vmatmul.mubr.bf16.gmra.mrb[0].mxu0 %v176
    %v360 = vpop.f32.mrb[0].mxu0
    %v361 = vadd.f32 %v127, %v360
    %v362 = vpop.f32.mrb[0].mxu0
    %v363 = vpop.f32.mrb[0].mxu0
    %v364 = vadd.f32 %v127, %v363
    %v365 = vpop.f32.mrb[0].mxu0
    %366 = vmatprep.mubr.bf16.mxu0 0
    %367 = vmatmul.mubr.bf16.gmra.mrb[0].mxu0 %v179
    %v368 = vpop.f32.mrb[0].mxu0
    %v369 = vadd.f32 %v127, %v368
    %v370 = vpop.f32.mrb[0].mxu0
    %v371 = vpop.f32.mrb[0].mxu0
    %v372 = vadd.f32 %v127, %v371
    %v373 = vpop.f32.mrb[0].mxu0
    %374 = vmatprep.mubr.bf16.mxu0 0
    %375 = vmatmul.mubr.bf16.gmra.mrb[0].mxu0 %v182
    %v376 = vpop.f32.mrb[0].mxu0
    %v377 = vadd.f32 %v127, %v376
    %v378 = vpop.f32.mrb[0].mxu0
    %v379 = vpop.f32.mrb[0].mxu0
    %v380 = vadd.f32 %v127, %v379
    %v381 = vpop.f32.mrb[0].mxu0
    %382 = vmatprep.mubr.bf16.mxu0 0
    %383 = vmatmul.mubr.bf16.gmra.mrb[0].mxu0 %v185
    %v384 = vpop.f32.mrb[0].mxu0
    %v385 = vadd.f32 %v127, %v384
    %v386 = vpop.f32.mrb[0].mxu0
    %v387 = vpop.f32.mrb[0].mxu0
    %v388 = vadd.f32 %v127, %v387
    %v389 = vpop.f32.mrb[0].mxu0
    %390 = vmatprep.mubr.bf16.mxu0 0
    %391 = vmatmul.mubr.bf16.gmra.mrb[0].mxu0 %v188
    %v392 = vpop.f32.mrb[0].mxu0
    %v393 = vadd.f32 %v127, %v392
    %v394 = vpop.f32.mrb[0].mxu0
    %v395 = vpop.f32.mrb[0].mxu0
    %v396 = vadd.f32 %v127, %v395
    %v397 = vpop.f32.mrb[0].mxu0
    %398 = vmatprep.mubr.bf16.mxu0 0
    %399 = vmatmul.mubr.bf16.gmra.mrb[0].mxu0 %v191
    %v400 = vpop.f32.mrb[0].mxu0
    %v401 = vadd.f32 %v127, %v400
    %v402 = vpop.f32.mrb[0].mxu0
    %v403 = vpop.f32.mrb[0].mxu0
    %v404 = vadd.f32 %v127, %v403
    %v405 = vpop.f32.mrb[0].mxu0
    %406 = vmatprep.mubr.bf16.mxu0 0
    %407 = vmatmul.mubr.bf16.gmra.mrb[0].mxu0 %v194
    %v408 = vpop.f32.mrb[0].mxu0
    %v409 = vadd.f32 %v127, %v408
    %v410 = vpop.f32.mrb[0].mxu0
    %v411 = vpop.f32.mrb[0].mxu0
    %v412 = vadd.f32 %v127, %v411
    %v413 = vpop.f32.mrb[0].mxu0
    %414 = vmatprep.mubr.bf16.mxu0 0
    %415 = vmatmul.mubr.bf16.gmra.mrb[0].mxu0 %v197
    %v416 = vpop.f32.mrb[0].mxu0
    %v417 = vadd.f32 %v127, %v416
    %v418 = vpop.f32.mrb[0].mxu0
    %v419 = vpop.f32.mrb[0].mxu0
    %v420 = vadd.f32 %v127, %v419
    %v421 = vpop.f32.mrb[0].mxu0
    %422 = vmatprep.mubr.bf16.mxu0 0
    %423 = vmatmul.mubr.bf16.gmra.mrb[0].mxu0 %v200
    %v424 = vpop.f32.mrb[0].mxu0
    %v425 = vadd.f32 %v127, %v424
    %v426 = vpop.f32.mrb[0].mxu0
    %v427 = vpop.f32.mrb[0].mxu0
    %v428 = vadd.f32 %v127, %v427
    %v429 = vpop.f32.mrb[0].mxu0
    %430 = vmatprep.mubr.bf16.mxu0 0
    %431 = vmatmul.mubr.bf16.gmra.mrb[0].mxu0 %v203
    %v432 = vpop.f32.mrb[0].mxu0
    %v433 = vadd.f32 %v127, %v432
    %v434 = vpop.f32.mrb[0].mxu0
    %v435 = vpop.f32.mrb[0].mxu0
    %v436 = vadd.f32 %v127, %v435
    %v437 = vpop.f32.mrb[0].mxu0
    %438 = vmatprep.mubr.bf16.mxu0 0
    %439 = vmatmul.mubr.bf16.gmra.mrb[0].mxu0 %v206
    %v440 = vpop.f32.mrb[0].mxu0
    %v441 = vadd.f32 %v127, %v440
    %v442 = vpop.f32.mrb[0].mxu0
    %v443 = vpop.f32.mrb[0].mxu0
    %v444 = vadd.f32 %v127, %v443
    %v445 = vpop.f32.mrb[0].mxu0
    %446 = vmatprep.mubr.bf16.mxu0 0
    %447 = vmatmul.mubr.bf16.gmra.mrb[0].mxu0 %v209
    %v448 = vpop.f32.mrb[0].mxu0
    %v449 = vadd.f32 %v127, %v448
    %v450 = vpop.f32.mrb[0].mxu0
    %v451 = vpop.f32.mrb[0].mxu0
    %v452 = vadd.f32 %v127, %v451
    %v453 = vpop.f32.mrb[0].mxu0
    %454 = vmatprep.mubr.bf16.mxu0 0
    %455 = vmatmul.mubr.bf16.gmra.mrb[0].mxu0 %v212
    %v456 = vpop.f32.mrb[0].mxu0
    %v457 = vadd.f32 %v127, %v456
    %v458 = vpop.f32.mrb[0].mxu0
    %v459 = vpop.f32.mrb[0].mxu0
    %v460 = vadd.f32 %v127, %v459
    %v461 = vpop.f32.mrb[0].mxu0
    %462 = vmatprep.mubr.bf16.mxu0 0
    %463 = vmatmul.mubr.bf16.gmra.mrb[0].mxu0 %v215
    %v464 = vpop.f32.mrb[0].mxu0
    %v465 = vadd.f32 %v127, %v464
    %v466 = vpop.f32.mrb[0].mxu0
    %v467 = vpop.f32.mrb[0].mxu0
    %v468 = vadd.f32 %v127, %v467
    %v469 = vpop.f32.mrb[0].mxu0
    %470 = vmatprep.mubr.bf16.mxu0 0
    %471 = vmatmul.mubr.bf16.gmra.mrb[0].mxu0 %v218
    %v472 = vpop.f32.mrb[0].mxu0
    %v473 = vadd.f32 %v127, %v472
    %v474 = vpop.f32.mrb[0].mxu0
    %v475 = vpop.f32.mrb[0].mxu0
    %v476 = vadd.f32 %v127, %v475
    %v477 = vpop.f32.mrb[0].mxu0
    %478 = vmatprep.mubr.bf16.mxu0 0
    %479 = vmatmul.mubr.bf16.gmra.mrb[0].mxu0 %v221
    %v480 = vpop.f32.mrb[0].mxu0
    %v481 = vadd.f32 %v127, %v480
    %v482 = vpop.f32.mrb[0].mxu0
    %v483 = vpop.f32.mrb[0].mxu0
    %v484 = vadd.f32 %v127, %v483
    %v485 = vpop.f32.mrb[0].mxu0
    %486 = vmatprep.mubr.bf16.mxu0 0
    %487 = vmatmul.mubr.bf16.gmra.mrb[0].mxu0 %v224
    %v488 = vpop.f32.mrb[0].mxu0
    %v489 = vadd.f32 %v127, %v488
    %v490 = vpop.f32.mrb[0].mxu0
    %v491 = vpop.f32.mrb[0].mxu0
    %v492 = vadd.f32 %v127, %v491
    %v493 = vpop.f32.mrb[0].mxu0
    %494 = vmatprep.mubr.bf16.mxu0 0
    %495 = vmatmul.mubr.bf16.gmra.mrb[0].mxu0 %v227
    %v496 = vpop.f32.mrb[0].mxu0
    %v497 = vadd.f32 %v127, %v496
    %v498 = vpop.f32.mrb[0].mxu0
    %v499 = vpop.f32.mrb[0].mxu0
    %v500 = vadd.f32 %v127, %v499
    %v501 = vpop.f32.mrb[0].mxu0
    %502 = vmatprep.mubr.bf16.mxu0 0
    %503 = vmatmul.mubr.bf16.gmra.mrb[0].mxu0 %v230
    %v504 = vpop.f32.mrb[0].mxu0
    %v505 = vadd.f32 %v127, %v504
    %v506 = vpop.f32.mrb[0].mxu0
    %v507 = vpop.f32.mrb[0].mxu0
    %v508 = vadd.f32 %v127, %v507
    %v509 = vpop.f32.mrb[0].mxu0
    %510 = vmatprep.mubr.bf16.mxu0 0
    %511 = vmatmul.mubr.bf16.gmra.mrb[0].mxu0 %v233
    %v512 = vpop.f32.mrb[0].mxu0
    %v513 = vadd.f32 %v127, %v512
    %v514 = vpop.f32.mrb[0].mxu0
    %v515 = vpop.f32.mrb[0].mxu0
    %v516 = vadd.f32 %v127, %v515
    %v517 = vpop.f32.mrb[0].mxu0
    %518 = vmatprep.mubr.bf16.mxu0 0
    %519 = vmatmul.mubr.bf16.gmra.mrb[0].mxu0 %v236
    %v520 = vpop.f32.mrb[0].mxu0
    %v521 = vadd.f32 %v127, %v520
    %v522 = vpop.f32.mrb[0].mxu0
    %v523 = vpop.f32.mrb[0].mxu0
    %v524 = vadd.f32 %v127, %v523
    %v525 = vpop.f32.mrb[0].mxu0
    %526 = vdwg.mxu0
    %v527 = vmax.f32 %v273, 0.0
    %v528 = vmax.f32 %v276, 0.0
    %v529 = vmax.f32 %v281, 0.0
    %v530 = vmax.f32 %v284, 0.0
    %v531 = vmax.f32 %v289, 0.0
    %v532 = vmax.f32 %v292, 0.0
    %v533 = vmax.f32 %v297, 0.0
    %v534 = vmax.f32 %v300, 0.0
    %v535 = vmax.f32 %v305, 0.0
    %v536 = vmax.f32 %v308, 0.0
    %v537 = vmax.f32 %v313, 0.0
    %v538 = vmax.f32 %v316, 0.0
    %v539 = vmax.f32 %v321, 0.0
    %v540 = vmax.f32 %v324, 0.0
    %v541 = vmax.f32 %v329, 0.0
    %v542 = vmax.f32 %v332, 0.0
    %v543 = vmax.f32 %v337, 0.0
    %v544 = vmax.f32 %v340, 0.0
    %v545 = vmax.f32 %v345, 0.0
    %v546 = vmax.f32 %v348, 0.0
    %v547 = vmax.f32 %v353, 0.0
    %v548 = vmax.f32 %v356, 0.0
    %v549 = vmax.f32 %v361, 0.0
    %v550 = vmax.f32 %v364, 0.0
    %v551 = vmax.f32 %v369, 0.0
    %v552 = vmax.f32 %v372, 0.0
    %v553 = vmax.f32 %v377, 0.0
    %v554 = vmax.f32 %v380, 0.0
    %v555 = vmax.f32 %v385, 0.0
    %v556 = vmax.f32 %v388, 0.0
    %v557 = vmax.f32 %v393, 0.0
    %v558 = vmax.f32 %v396, 0.0
    %v559 = vmax.f32 %v401, 0.0
    %v560 = vmax.f32 %v404, 0.0
    %v561 = vmax.f32 %v409, 0.0
    %v562 = vmax.f32 %v412, 0.0
    %v563 = vmax.f32 %v417, 0.0
    %v564 = vmax.f32 %v420, 0.0
    %v565 = vmax.f32 %v425, 0.0
    %v566 = vmax.f32 %v428, 0.0
    %v567 = vmax.f32 %v433, 0.0
    %v568 = vmax.f32 %v436, 0.0
    %v569 = vmax.f32 %v441, 0.0
    %v570 = vmax.f32 %v444, 0.0
    %v571 = vmax.f32 %v449, 0.0
    %v572 = vmax.f32 %v452, 0.0
    %v573 = vmax.f32 %v457, 0.0
    %v574 = vmax.f32 %v460, 0.0
    %v575 = vmax.f32 %v465, 0.0
    %v576 = vmax.f32 %v468, 0.0
    %v577 = vmax.f32 %v473, 0.0
    %v578 = vmax.f32 %v476, 0.0
    %v579 = vmax.f32 %v481, 0.0
    %v580 = vmax.f32 %v484, 0.0
    %v581 = vmax.f32 %v489, 0.0
    %v582 = vmax.f32 %v492, 0.0
    %v583 = vmax.f32 %v497, 0.0
    %v584 = vmax.f32 %v500, 0.0
    %v585 = vmax.f32 %v505, 0.0
    %v586 = vmax.f32 %v508, 0.0
    %v587 = vmax.f32 %v513, 0.0
    %v588 = vmax.f32 %v516, 0.0
    %v589 = vmax.f32 %v521, 0.0
    %v590 = vmax.f32 %v524, 0.0
    %v591 = vpack.c.bf16 %v528, %v527
    %v592 = vpack.c.bf16 %v530, %v529
    %v593 = vpack.c.bf16 %v532, %v531
    %v594 = vpack.c.bf16 %v534, %v533
    %v595 = vpack.c.bf16 %v536, %v535
    %v596 = vpack.c.bf16 %v538, %v537
    %v597 = vpack.c.bf16 %v540, %v539
    %v598 = vpack.c.bf16 %v542, %v541
    %v599 = vpack.c.bf16 %v544, %v543
    %v600 = vpack.c.bf16 %v546, %v545
    %v601 = vpack.c.bf16 %v548, %v547
    %v602 = vpack.c.bf16 %v550, %v549
    %v603 = vpack.c.bf16 %v552, %v551
    %v604 = vpack.c.bf16 %v554, %v553
    %v605 = vpack.c.bf16 %v556, %v555
    %v606 = vpack.c.bf16 %v558, %v557
    %v607 = vpack.c.bf16 %v560, %v559
    %v608 = vpack.c.bf16 %v562, %v561
    %v609 = vpack.c.bf16 %v564, %v563
    %v610 = vpack.c.bf16 %v566, %v565
    %v611 = vpack.c.bf16 %v568, %v567
    %v612 = vpack.c.bf16 %v570, %v569
    %v613 = vpack.c.bf16 %v572, %v571
    %v614 = vpack.c.bf16 %v574, %v573
    %v615 = vpack.c.bf16 %v576, %v575
    %v616 = vpack.c.bf16 %v578, %v577
    %v617 = vpack.c.bf16 %v580, %v579
    %v618 = vpack.c.bf16 %v582, %v581
    %v619 = vpack.c.bf16 %v584, %v583
    %v620 = vpack.c.bf16 %v586, %v585
    %v621 = vpack.c.bf16 %v588, %v587
    %v622 = vpack.c.bf16 %v590, %v589
    %v623 = vld [vmem:[%s3] sm:$0xf]
    %v624 = vld [vmem:[%s3 + $0x4] sm:$0xf]
    %v625 = vld [vmem:[%s3 + $0x8] sm:$0xf]
    %v626 = vld [vmem:[%s3 + $0xc] sm:$0xf]
    %v627 = vld [vmem:[%s3 + $0x10] sm:$0xf]
    %v628 = vld [vmem:[%s3 + $0x14] sm:$0xf]
    %v629 = vld [vmem:[%s3 + $0x18] sm:$0xf]
    %v630 = vld [vmem:[%s3 + $0x1c] sm:$0xf]
    %v631 = vld [vmem:[%s3 + $0x20] sm:$0xf]
    %v632 = vld [vmem:[%s3 + $0x24] sm:$0xf]
    %v633 = vld [vmem:[%s3 + $0x28] sm:$0xf]
    %v634 = vld [vmem:[%s3 + $0x2c] sm:$0xf]
    %v635 = vld [vmem:[%s3 + $0x30] sm:$0xf]
    %v636 = vld [vmem:[%s3 + $0x34] sm:$0xf]
    %v637 = vld [vmem:[%s3 + $0x38] sm:$0xf]
    %v638 = vld [vmem:[%s3 + $0x3c] sm:$0xf]
    %v639 = vld [vmem:[%s4] sm:$0x1]
    %v641 = vlaneseq
    %v642 = vshrl.u32 %v641, 7
    %v643 = vsub.s32 0, %v642
    %v644 = vrot.slane %v639, %v643
    %v662 = vunpack.c.l.b16 %v623
    %v663 = vunpack.c.l.b16 %v624
    %v664 = vunpack.c.l.b16 %v625
    %v665 = vunpack.c.l.b16 %v626
    %v666 = vunpack.c.l.b16 %v627
    %v667 = vunpack.c.l.b16 %v628
    %v668 = vunpack.c.l.b16 %v629
    %v669 = vunpack.c.l.b16 %v630
    %v670 = vunpack.c.l.b16 %v631
    %v671 = vunpack.c.l.b16 %v632
    %v672 = vunpack.c.l.b16 %v633
    %v673 = vunpack.c.l.b16 %v634
    %v674 = vunpack.c.l.b16 %v635
    %v675 = vunpack.c.l.b16 %v636
    %v676 = vunpack.c.l.b16 %v637
    %v677 = vunpack.c.l.b16 %v638
    %v678 = vpack.c.b16 %v663, %v662
    %v679 = vpack.c.b16 %v665, %v664
    %v680 = vpack.c.b16 %v667, %v666
    %v681 = vpack.c.b16 %v669, %v668
    %v682 = vpack.c.b16 %v671, %v670
    %v683 = vpack.c.b16 %v673, %v672
    %v684 = vpack.c.b16 %v675, %v674
    %v685 = vpack.c.b16 %v677, %v676
    %694 = vmatprep.subr.bf16.mxu0 0
    %695 = vmatpush1.bf16.msra.mxu0 %v678
    %696 = vmatprep.subr.bf16.mxu0 0
    %697 = vmatpush1.bf16.msra.mxu0 %v679
    %698 = vmatprep.subr.bf16.mxu0 0
    %699 = vmatpush1.bf16.msra.mxu0 %v680
    %700 = vmatprep.subr.bf16.mxu0 0
    %701 = vmatpush1.bf16.msra.mxu0 %v681
    %702 = vmatprep.subr.bf16.mxu0 0
    %703 = vmatpush1.bf16.msra.mxu0 %v682
    %704 = vmatprep.subr.bf16.mxu0 0
    %705 = vmatpush1.bf16.msra.mxu0 %v683
    %706 = vmatprep.subr.bf16.mxu0 0
    %707 = vmatpush1.bf16.msra.mxu0 %v684
    %708 = vmatprep.subr.bf16.mxu0 0
    %709 = vmatpush1.bf16.msra.mxu0 %v685
    %710 = vmatprep.subr.bf16.mxu0 0
    %711 = vmatpush1.bf16.msra.mxu0 0
    %712 = vmatprep.subr.bf16.mxu0 0
    %713 = vmatpush1.bf16.msra.mxu0 0
    %714 = vmatprep.subr.bf16.mxu0 0
    %715 = vmatpush1.bf16.msra.mxu0 0
    %716 = vmatprep.subr.bf16.mxu0 0
    %717 = vmatpush1.bf16.msra.mxu0 0
    %718 = vmatprep.subr.bf16.mxu0 0
    %719 = vmatpush1.bf16.msra.mxu0 0
    %720 = vmatprep.subr.bf16.mxu0 0
    %721 = vmatpush1.bf16.msra.mxu0 0
    %722 = vmatprep.subr.bf16.mxu0 0
    %723 = vmatpush1.bf16.msra.mxu0 0
    %724 = vmatprep.subr.bf16.mxu0 0
    %725 = vmatpush1.bf16.msra.mxu0 0
    %726 = vmatprep.mubr.bf16.mxu0 0
    %727 = vmatmul.mubr.bf16.gmra.mrb[0].mxu0 %v591
    %v728 = vpop.f32.mrb[0].mxu0
    %v729 = vadd.f32 %v644, %v728
    %v730 = vpop.f32.mrb[0].mxu0
    %v731 = vpop.f32.mrb[0].mxu0
    %v732 = vadd.f32 %v644, %v731
    %v733 = vpop.f32.mrb[0].mxu0
    %734 = vmatprep.mubr.bf16.mxu0 0
    %735 = vmatmul.mubr.bf16.gmra.mrb[0].mxu0 %v592
    %v736 = vpop.f32.mrb[0].mxu0
    %v737 = vadd.f32 %v644, %v736
    %v738 = vpop.f32.mrb[0].mxu0
    %v739 = vpop.f32.mrb[0].mxu0
    %v740 = vadd.f32 %v644, %v739
    %v741 = vpop.f32.mrb[0].mxu0
    %742 = vmatprep.mubr.bf16.mxu0 0
    %743 = vmatmul.mubr.bf16.gmra.mrb[0].mxu0 %v593
    %v744 = vpop.f32.mrb[0].mxu0
    %v745 = vadd.f32 %v644, %v744
    %v746 = vpop.f32.mrb[0].mxu0
    %v747 = vpop.f32.mrb[0].mxu0
    %v748 = vadd.f32 %v644, %v747
    %v749 = vpop.f32.mrb[0].mxu0
    %750 = vmatprep.mubr.bf16.mxu0 0
    %751 = vmatmul.mubr.bf16.gmra.mrb[0].mxu0 %v594
    %v752 = vpop.f32.mrb[0].mxu0
    %v753 = vadd.f32 %v644, %v752
    %v754 = vpop.f32.mrb[0].mxu0
    %v755 = vpop.f32.mrb[0].mxu0
    %v756 = vadd.f32 %v644, %v755
    %v757 = vpop.f32.mrb[0].mxu0
    %758 = vmatprep.mubr.bf16.mxu0 0
    %759 = vmatmul.mubr.bf16.gmra.mrb[0].mxu0 %v595
    %v760 = vpop.f32.mrb[0].mxu0
    %v761 = vadd.f32 %v644, %v760
    %v762 = vpop.f32.mrb[0].mxu0
    %v763 = vpop.f32.mrb[0].mxu0
    %v764 = vadd.f32 %v644, %v763
    %v765 = vpop.f32.mrb[0].mxu0
    %766 = vmatprep.mubr.bf16.mxu0 0
    %767 = vmatmul.mubr.bf16.gmra.mrb[0].mxu0 %v596
    %v768 = vpop.f32.mrb[0].mxu0
    %v769 = vadd.f32 %v644, %v768
    %v770 = vpop.f32.mrb[0].mxu0
    %v771 = vpop.f32.mrb[0].mxu0
    %v772 = vadd.f32 %v644, %v771
    %v773 = vpop.f32.mrb[0].mxu0
    %774 = vmatprep.mubr.bf16.mxu0 0
    %775 = vmatmul.mubr.bf16.gmra.mrb[0].mxu0 %v597
    %v776 = vpop.f32.mrb[0].mxu0
    %v777 = vadd.f32 %v644, %v776
    %v778 = vpop.f32.mrb[0].mxu0
    %v779 = vpop.f32.mrb[0].mxu0
    %v780 = vadd.f32 %v644, %v779
    %v781 = vpop.f32.mrb[0].mxu0
    %782 = vmatprep.mubr.bf16.mxu0 0
    %783 = vmatmul.mubr.bf16.gmra.mrb[0].mxu0 %v598
    %v784 = vpop.f32.mrb[0].mxu0
    %v785 = vadd.f32 %v644, %v784
    %v786 = vpop.f32.mrb[0].mxu0
    %v787 = vpop.f32.mrb[0].mxu0
    %v788 = vadd.f32 %v644, %v787
    %v789 = vpop.f32.mrb[0].mxu0
    %790 = vmatprep.mubr.bf16.mxu0 0
    %791 = vmatmul.mubr.bf16.gmra.mrb[0].mxu0 %v599
    %v792 = vpop.f32.mrb[0].mxu0
    %v793 = vadd.f32 %v644, %v792
    %v794 = vpop.f32.mrb[0].mxu0
    %v795 = vpop.f32.mrb[0].mxu0
    %v796 = vadd.f32 %v644, %v795
    %v797 = vpop.f32.mrb[0].mxu0
    %798 = vmatprep.mubr.bf16.mxu0 0
    %799 = vmatmul.mubr.bf16.gmra.mrb[0].mxu0 %v600
    %v800 = vpop.f32.mrb[0].mxu0
    %v801 = vadd.f32 %v644, %v800
    %v802 = vpop.f32.mrb[0].mxu0
    %v803 = vpop.f32.mrb[0].mxu0
    %v804 = vadd.f32 %v644, %v803
    %v805 = vpop.f32.mrb[0].mxu0
    %806 = vmatprep.mubr.bf16.mxu0 0
    %807 = vmatmul.mubr.bf16.gmra.mrb[0].mxu0 %v601
    %v808 = vpop.f32.mrb[0].mxu0
    %v809 = vadd.f32 %v644, %v808
    %v810 = vpop.f32.mrb[0].mxu0
    %v811 = vpop.f32.mrb[0].mxu0
    %v812 = vadd.f32 %v644, %v811
    %v813 = vpop.f32.mrb[0].mxu0
    %814 = vmatprep.mubr.bf16.mxu0 0
    %815 = vmatmul.mubr.bf16.gmra.mrb[0].mxu0 %v602
    %v816 = vpop.f32.mrb[0].mxu0
    %v817 = vadd.f32 %v644, %v816
    %v818 = vpop.f32.mrb[0].mxu0
    %v819 = vpop.f32.mrb[0].mxu0
    %v820 = vadd.f32 %v644, %v819
    %v821 = vpop.f32.mrb[0].mxu0
    %822 = vmatprep.mubr.bf16.mxu0 0
    %823 = vmatmul.mubr.bf16.gmra.mrb[0].mxu0 %v603
    %v824 = vpop.f32.mrb[0].mxu0
    %v825 = vadd.f32 %v644, %v824
    %v826 = vpop.f32.mrb[0].mxu0
    %v827 = vpop.f32.mrb[0].mxu0
    %v828 = vadd.f32 %v644, %v827
    %v829 = vpop.f32.mrb[0].mxu0
    %830 = vmatprep.mubr.bf16.mxu0 0
    %831 = vmatmul.mubr.bf16.gmra.mrb[0].mxu0 %v604
    %v832 = vpop.f32.mrb[0].mxu0
    %v833 = vadd.f32 %v644, %v832
    %v834 = vpop.f32.mrb[0].mxu0
    %v835 = vpop.f32.mrb[0].mxu0
    %v836 = vadd.f32 %v644, %v835
    %v837 = vpop.f32.mrb[0].mxu0
    %838 = vmatprep.mubr.bf16.mxu0 0
    %839 = vmatmul.mubr.bf16.gmra.mrb[0].mxu0 %v605
    %v840 = vpop.f32.mrb[0].mxu0
    %v841 = vadd.f32 %v644, %v840
    %v842 = vpop.f32.mrb[0].mxu0
    %v843 = vpop.f32.mrb[0].mxu0
    %v844 = vadd.f32 %v644, %v843
    %v845 = vpop.f32.mrb[0].mxu0
    %846 = vmatprep.mubr.bf16.mxu0 0
    %847 = vmatmul.mubr.bf16.gmra.mrb[0].mxu0 %v606
    %v848 = vpop.f32.mrb[0].mxu0
    %v849 = vadd.f32 %v644, %v848
    %v850 = vpop.f32.mrb[0].mxu0
    %v851 = vpop.f32.mrb[0].mxu0
    %v852 = vadd.f32 %v644, %v851
    %v853 = vpop.f32.mrb[0].mxu0
    %854 = vmatprep.mubr.bf16.mxu0 0
    %855 = vmatmul.mubr.bf16.gmra.mrb[0].mxu0 %v607
    %v856 = vpop.f32.mrb[0].mxu0
    %v857 = vadd.f32 %v644, %v856
    %v858 = vpop.f32.mrb[0].mxu0
    %v859 = vpop.f32.mrb[0].mxu0
    %v860 = vadd.f32 %v644, %v859
    %v861 = vpop.f32.mrb[0].mxu0
    %862 = vmatprep.mubr.bf16.mxu0 0
    %863 = vmatmul.mubr.bf16.gmra.mrb[0].mxu0 %v608
    %v864 = vpop.f32.mrb[0].mxu0
    %v865 = vadd.f32 %v644, %v864
    %v866 = vpop.f32.mrb[0].mxu0
    %v867 = vpop.f32.mrb[0].mxu0
    %v868 = vadd.f32 %v644, %v867
    %v869 = vpop.f32.mrb[0].mxu0
    %870 = vmatprep.mubr.bf16.mxu0 0
    %871 = vmatmul.mubr.bf16.gmra.mrb[0].mxu0 %v609
    %v872 = vpop.f32.mrb[0].mxu0
    %v873 = vadd.f32 %v644, %v872
    %v874 = vpop.f32.mrb[0].mxu0
    %v875 = vpop.f32.mrb[0].mxu0
    %v876 = vadd.f32 %v644, %v875
    %v877 = vpop.f32.mrb[0].mxu0
    %878 = vmatprep.mubr.bf16.mxu0 0
    %879 = vmatmul.mubr.bf16.gmra.mrb[0].mxu0 %v610
    %v880 = vpop.f32.mrb[0].mxu0
    %v881 = vadd.f32 %v644, %v880
    %v882 = vpop.f32.mrb[0].mxu0
    %v883 = vpop.f32.mrb[0].mxu0
    %v884 = vadd.f32 %v644, %v883
    %v885 = vpop.f32.mrb[0].mxu0
    %886 = vmatprep.mubr.bf16.mxu0 0
    %887 = vmatmul.mubr.bf16.gmra.mrb[0].mxu0 %v611
    %v888 = vpop.f32.mrb[0].mxu0
    %v889 = vadd.f32 %v644, %v888
    %v890 = vpop.f32.mrb[0].mxu0
    %v891 = vpop.f32.mrb[0].mxu0
    %v892 = vadd.f32 %v644, %v891
    %v893 = vpop.f32.mrb[0].mxu0
    %894 = vmatprep.mubr.bf16.mxu0 0
    %895 = vmatmul.mubr.bf16.gmra.mrb[0].mxu0 %v612
    %v896 = vpop.f32.mrb[0].mxu0
    %v897 = vadd.f32 %v644, %v896
    %v898 = vpop.f32.mrb[0].mxu0
    %v899 = vpop.f32.mrb[0].mxu0
    %v900 = vadd.f32 %v644, %v899
    %v901 = vpop.f32.mrb[0].mxu0
    %902 = vmatprep.mubr.bf16.mxu0 0
    %903 = vmatmul.mubr.bf16.gmra.mrb[0].mxu0 %v613
    %v904 = vpop.f32.mrb[0].mxu0
    %v905 = vadd.f32 %v644, %v904
    %v906 = vpop.f32.mrb[0].mxu0
    %v907 = vpop.f32.mrb[0].mxu0
    %v908 = vadd.f32 %v644, %v907
    %v909 = vpop.f32.mrb[0].mxu0
    %910 = vmatprep.mubr.bf16.mxu0 0
    %911 = vmatmul.mubr.bf16.gmra.mrb[0].mxu0 %v614
    %v912 = vpop.f32.mrb[0].mxu0
    %v913 = vadd.f32 %v644, %v912
    %v914 = vpop.f32.mrb[0].mxu0
    %v915 = vpop.f32.mrb[0].mxu0
    %v916 = vadd.f32 %v644, %v915
    %v917 = vpop.f32.mrb[0].mxu0
    %918 = vmatprep.mubr.bf16.mxu0 0
    %919 = vmatmul.mubr.bf16.gmra.mrb[0].mxu0 %v615
    %v920 = vpop.f32.mrb[0].mxu0
    %v921 = vadd.f32 %v644, %v920
    %v922 = vpop.f32.mrb[0].mxu0
    %v923 = vpop.f32.mrb[0].mxu0
    %v924 = vadd.f32 %v644, %v923
    %v925 = vpop.f32.mrb[0].mxu0
    %926 = vmatprep.mubr.bf16.mxu0 0
    %927 = vmatmul.mubr.bf16.gmra.mrb[0].mxu0 %v616
    %v928 = vpop.f32.mrb[0].mxu0
    %v929 = vadd.f32 %v644, %v928
    %v930 = vpop.f32.mrb[0].mxu0
    %v931 = vpop.f32.mrb[0].mxu0
    %v932 = vadd.f32 %v644, %v931
    %v933 = vpop.f32.mrb[0].mxu0
    %934 = vmatprep.mubr.bf16.mxu0 0
    %935 = vmatmul.mubr.bf16.gmra.mrb[0].mxu0 %v617
    %v936 = vpop.f32.mrb[0].mxu0
    %v937 = vadd.f32 %v644, %v936
    %v938 = vpop.f32.mrb[0].mxu0
    %v939 = vpop.f32.mrb[0].mxu0
    %v940 = vadd.f32 %v644, %v939
    %v941 = vpop.f32.mrb[0].mxu0
    %942 = vmatprep.mubr.bf16.mxu0 0
    %943 = vmatmul.mubr.bf16.gmra.mrb[0].mxu0 %v618
    %v944 = vpop.f32.mrb[0].mxu0
    %v945 = vadd.f32 %v644, %v944
    %v946 = vpop.f32.mrb[0].mxu0
    %v947 = vpop.f32.mrb[0].mxu0
    %v948 = vadd.f32 %v644, %v947
    %v949 = vpop.f32.mrb[0].mxu0
    %950 = vmatprep.mubr.bf16.mxu0 0
    %951 = vmatmul.mubr.bf16.gmra.mrb[0].mxu0 %v619
    %v952 = vpop.f32.mrb[0].mxu0
    %v953 = vadd.f32 %v644, %v952
    %v954 = vpop.f32.mrb[0].mxu0
    %v955 = vpop.f32.mrb[0].mxu0
    %v956 = vadd.f32 %v644, %v955
    %v957 = vpop.f32.mrb[0].mxu0
    %958 = vmatprep.mubr.bf16.mxu0 0
    %959 = vmatmul.mubr.bf16.gmra.mrb[0].mxu0 %v620
    %v960 = vpop.f32.mrb[0].mxu0
    %v961 = vadd.f32 %v644, %v960
    %v962 = vpop.f32.mrb[0].mxu0
    %v963 = vpop.f32.mrb[0].mxu0
    %v964 = vadd.f32 %v644, %v963
    %v965 = vpop.f32.mrb[0].mxu0
    %966 = vmatprep.mubr.bf16.mxu0 0
    %967 = vmatmul.mubr.bf16.gmra.mrb[0].mxu0 %v621
    %v968 = vpop.f32.mrb[0].mxu0
    %v969 = vadd.f32 %v644, %v968
    %v970 = vpop.f32.mrb[0].mxu0
    %v971 = vpop.f32.mrb[0].mxu0
    %v972 = vadd.f32 %v644, %v971
    %v973 = vpop.f32.mrb[0].mxu0
    %974 = vmatprep.mubr.bf16.mxu0 0
    %975 = vmatmul.mubr.bf16.gmra.mrb[0].mxu0 %v622
    %v976 = vpop.f32.mrb[0].mxu0
    %v977 = vadd.f32 %v644, %v976
    %v978 = vpop.f32.mrb[0].mxu0
    %v979 = vpop.f32.mrb[0].mxu0
    %v980 = vadd.f32 %v644, %v979
    %v981 = vpop.f32.mrb[0].mxu0
    %982 = vdwg.mxu0
    %983 = vst [vmem:[#allocation2] sm:$0xff] %v729
    %984 = vst [vmem:[#allocation2 + $0x8] sm:$0xff] %v732
    %985 = vst [vmem:[#allocation2 + $0x10] sm:$0xff] %v737
    %986 = vst [vmem:[#allocation2 + $0x18] sm:$0xff] %v740
    %987 = vst [vmem:[#allocation2 + $0x20] sm:$0xff] %v745
    %988 = vst [vmem:[#allocation2 + $0x28] sm:$0xff] %v748
    %989 = vst [vmem:[#allocation2 + $0x30] sm:$0xff] %v753
    %990 = vst [vmem:[#allocation2 + $0x38] sm:$0xff] %v756
    %991 = vst [vmem:[#allocation2 + $0x40] sm:$0xff] %v761
    %992 = vst [vmem:[#allocation2 + $0x48] sm:$0xff] %v764
    %993 = vst [vmem:[#allocation2 + $0x50] sm:$0xff] %v769
    %994 = vst [vmem:[#allocation2 + $0x58] sm:$0xff] %v772
    %995 = vst [vmem:[#allocation2 + $0x60] sm:$0xff] %v777
    %996 = vst [vmem:[#allocation2 + $0x68] sm:$0xff] %v780
    %997 = vst [vmem:[#allocation2 + $0x70] sm:$0xff] %v785
    %998 = vst [vmem:[#allocation2 + $0x78] sm:$0xff] %v788
    %999 = vst [vmem:[#allocation2 + $0x80] sm:$0xff] %v793
    %1000 = vst [vmem:[#allocation2 + $0x88] sm:$0xff] %v796
    %1001 = vst [vmem:[#allocation2 + $0x90] sm:$0xff] %v801
    %1002 = vst [vmem:[#allocation2 + $0x98] sm:$0xff] %v804
    %1003 = vst [vmem:[#allocation2 + $0xa0] sm:$0xff] %v809
    %1004 = vst [vmem:[#allocation2 + $0xa8] sm:$0xff] %v812
    %1005 = vst [vmem:[#allocation2 + $0xb0] sm:$0xff] %v817
    %1006 = vst [vmem:[#allocation2 + $0xb8] sm:$0xff] %v820
    %1007 = vst [vmem:[#allocation2 + $0xc0] sm:$0xff] %v825
    %1008 = vst [vmem:[#allocation2 + $0xc8] sm:$0xff] %v828
    %1009 = vst [vmem:[#allocation2 + $0xd0] sm:$0xff] %v833
    %1010 = vst [vmem:[#allocation2 + $0xd8] sm:$0xff] %v836
    %1011 = vst [vmem:[#allocation2 + $0xe0] sm:$0xff] %v841
    %1012 = vst [vmem:[#allocation2 + $0xe8] sm:$0xff] %v844
    %1013 = vst [vmem:[#allocation2 + $0xf0] sm:$0xff] %v849
    %1014 = vst [vmem:[#allocation2 + $0xf8] sm:$0xff] %v852
    %1015 = vst [vmem:[#allocation2 + $0x100] sm:$0xff] %v857
    %1016 = vst [vmem:[#allocation2 + $0x108] sm:$0xff] %v860
    %1017 = vst [vmem:[#allocation2 + $0x110] sm:$0xff] %v865
    %1018 = vst [vmem:[#allocation2 + $0x118] sm:$0xff] %v868
    %1019 = vst [vmem:[#allocation2 + $0x120] sm:$0xff] %v873
    %1020 = vst [vmem:[#allocation2 + $0x128] sm:$0xff] %v876
    %1021 = vst [vmem:[#allocation2 + $0x130] sm:$0xff] %v881
    %1022 = vst [vmem:[#allocation2 + $0x138] sm:$0xff] %v884
    %1023 = vst [vmem:[#allocation2 + $0x140] sm:$0xff] %v889
    %1024 = vst [vmem:[#allocation2 + $0x148] sm:$0xff] %v892
    %1025 = vst [vmem:[#allocation2 + $0x150] sm:$0xff] %v897
    %1026 = vst [vmem:[#allocation2 + $0x158] sm:$0xff] %v900
    %1027 = vst [vmem:[#allocation2 + $0x160] sm:$0xff] %v905
    %1028 = vst [vmem:[#allocation2 + $0x168] sm:$0xff] %v908
    %1029 = vst [vmem:[#allocation2 + $0x170] sm:$0xff] %v913
    %1030 = vst [vmem:[#allocation2 + $0x178] sm:$0xff] %v916
    %1031 = vst [vmem:[#allocation2 + $0x180] sm:$0xff] %v921
    %1032 = vst [vmem:[#allocation2 + $0x188] sm:$0xff] %v924
    %1033 = vst [vmem:[#allocation2 + $0x190] sm:$0xff] %v929
    %1034 = vst [vmem:[#allocation2 + $0x198] sm:$0xff] %v932
    %1035 = vst [vmem:[#allocation2 + $0x1a0] sm:$0xff] %v937
    %1036 = vst [vmem:[#allocation2 + $0x1a8] sm:$0xff] %v940
    %1037 = vst [vmem:[#allocation2 + $0x1b0] sm:$0xff] %v945
    %1038 = vst [vmem:[#allocation2 + $0x1b8] sm:$0xff] %v948
    %1039 = vst [vmem:[#allocation2 + $0x1c0] sm:$0xff] %v953
    %1040 = vst [vmem:[#allocation2 + $0x1c8] sm:$0xff] %v956
    %1041 = vst [vmem:[#allocation2 + $0x1d0] sm:$0xff] %v961
    %1042 = vst [vmem:[#allocation2 + $0x1d8] sm:$0xff] %v964
    %1043 = vst [vmem:[#allocation2 + $0x1e0] sm:$0xff] %v969
    %1044 = vst [vmem:[#allocation2 + $0x1e8] sm:$0xff] %v972
    %1045 = vst [vmem:[#allocation2 + $0x1f0] sm:$0xff] %v977
    %1046 = vst [vmem:[#allocation2 + $0x1f8] sm:$0xff] %v980
    // Predicated region
    $region22: #{tpu_custom_call.1} parent=1 // pred_check
      _
    $region23: #{tpu_custom_call.1} parent=1 // pred_check_branch
      %1048 = sbr.rel (0) target = $region25
    $region24: #{tpu_custom_call.1} parent=1 // pred_region
      %s1050 = ssub.s32 8192, 8064
      %1051 = vsyncadd [#allocation3], %s1050
      %s1052 = sshll.u32 [#allocation2], 4
      %s1053 = int_to_ptr.vmem [resolvable:$true] %s1052
      %1058 = dma.vmem_to_hbm [thread:$0]  %s1053, 8064, %s5, [#allocation3], 128, 128, 8
    $region25: #{tpu_custom_call.1} parent=1 // pred_fallthru
      _
    // Predicated region
    $region26: #{tpu_custom_call.1} parent=1 // pred_check
      _
    $region27: #{tpu_custom_call.1} parent=1 // pred_check_branch
      %1060 = sbr.rel (0) target = $region29
    $region28: #{tpu_custom_call.1} parent=1 // pred_region
      %1061 = dma.done [#allocation3], 8192
    $region29: #{tpu_custom_call.1} parent=1 // pred_fallthru
      _
    %1062 = vsyncpa [#allocation3], 1

</llo_original>
